<compile_context>
chip_gen: v5e
topology: v5e:2x2
jax: 0.10.0
libtpu: 0.0.40
codegen_flags: <defaults>
</compile_context>

<pallas_src>
import functools

import jax
import jax.numpy as jnp
from jax import lax
from jax.experimental import pallas as pl
from jax.experimental.pallas import tpu as pltpu


def _round_up(x, m):
    return (x + m - 1) // m * m


def _vmem_capacity_bytes():
    try:
        return int(pltpu.get_tpu_info().vmem_capacity_bytes)
    except Exception:
        return 64 * 1024 * 1024  # conservative (v7x per-core VMEM)


def _supcon_kernel(f1_ref, f2_ref, wm_ref, psum_ref, out_ref,
                   m_acc, l_acc, ws_acc, wsum_acc, *,
                   inv_temp, tn, pad_cols, f2_resident):
    """Grid = (row_tiles, m_tiles); the M axis is the (inner) reduction axis."""
    j = pl.program_id(1)

    @pl.when(j == 0)
    def _init():
        m_acc[...] = jnp.full_like(m_acc, -jnp.inf)   # running row max
        l_acc[...] = jnp.zeros_like(l_acc)            # running sum exp(sim - m)
        ws_acc[...] = jnp.zeros_like(ws_acc)          # running sum wm * sim
        wsum_acc[...] = jnp.zeros_like(wsum_acc)      # running sum wm

    if f2_resident:
        # feature2 lives fully in VMEM (fetched once); take this step's slice.
        f2 = f2_ref[pl.ds(pl.multiple_of(j * tn, 128), tn), :]
    else:
        f2 = f2_ref[...]

    # sim tile [TM, TN]: contract both bf16 operands on their last axis;
    # MXU accumulates in f32.
    sim = lax.dot_general(
        f1_ref[...], f2,
        dimension_numbers=(((1,), (1,)), ((), ())),
        preferred_element_type=jnp.float32,
    ) * inv_temp

    wm = wm_ref[...].astype(jnp.float32)

    # Online (numerically stable) log-sum-exp over the M axis.  Padded columns
    # (sim exactly 0, since padded feature2 rows are zero) are included here
    # and removed analytically in the finalize step.
    m_prev = m_acc[...]
    m_new = jnp.maximum(m_prev, jnp.max(sim, axis=1, keepdims=True))
    l_acc[...] = (l_acc[...] * jnp.exp(m_prev - m_new)
                  + jnp.sum(jnp.exp(sim - m_new), axis=1, keepdims=True))
    m_acc[...] = m_new

    # Linear accumulators for the fused mask reduction (no log_prob tile).
    # Padded columns contribute 0 because the padded weight_mask is 0.
    ws_acc[...] = ws_acc[...] + jnp.sum(wm * sim, axis=1, keepdims=True)
    wsum_acc[...] = wsum_acc[...] + jnp.sum(wm, axis=1, keepdims=True)

    @pl.when(j == pl.num_programs(1) - 1)
    def _finalize():
        l = l_acc[...]
        if pad_cols:
            # Padded feature2 rows are exactly zero -> each padded column
            # contributed exp(0 - m) to l; remove them analytically.
            l = l - pad_cols * jnp.exp(-m_acc[...])
        lse = m_acc[...] + jnp.log(l)                 # log sum_j exp(sim_ij)
        num = ws_acc[...] - wsum_acc[...] * lse       # sum_j wm_ij*(sim_ij - lse_i)
        out_ref[...] = -num / psum_ref[...]           # per-row loss, written once


def supcon_loss(feature1, feature2, positive_mask, weight_mask,
                temperature=2.5):
    """Pallas implementation of SupConLoss.forward (returns a scalar)."""
    N, D = feature1.shape
    M, D2 = feature2.shape
    assert D == D2
    assert positive_mask.shape == (N, M) and weight_mask.shape == (N, M)

    cdt = jnp.bfloat16
    itemsize = 2

    # Only the row-sum of positive_mask is ever needed: compute it once in XLA
    # ([N, 1], f32) instead of streaming the full [N, M] mask through the kernel.
    psum = jnp.sum(positive_mask.astype(jnp.float32), axis=1, keepdims=True)

    # ---- tile plan (lane/sublane aligned, VMEM-budgeted) -------------------
    D_pad = _round_up(D, 128)                       # lane-aligned contraction dim

    # Row tiles: multiple of 16 (bf16 sublane packing); aim for >= 2 tiles so
    # the "parallel" axis spreads across v7x's 2 TensorCores; cap at 512.
    want_row_tiles = 1 if N <= 16 else max(2, -(-N // 512))
    TM = min(512, _round_up(-(-N // want_row_tiles), 16))
    N_pad = _round_up(N, TM)
    n_row_tiles = N_pad // TM

    # VMEM budget: ~48 MiB of v7x's 64 MiB physical, up to 96 MiB on v5e/v6e.
    budget = min(_vmem_capacity_bytes() * 3 // 4, 96 * 1024 * 1024)

    M_r128 = _round_up(M, 128)
    tn_try = min(2048, M_r128)
    while True:
        TN = max(128, (tn_try // 128) * 128)        # lane-aligned M tile
        M_pad = _round_up(M, TN)
        f2_resident = (n_row_tiles > 1
                       and M_pad * D_pad * itemsize <= 8 * 1024 * 1024)
        f2_foot = (M_pad * D_pad if f2_resident else TN * D_pad) * itemsize * 2
        foot = (2 * TM * D_pad * itemsize           # feature1 (double-buffered)
                + 2 * TM * TN * itemsize            # weight_mask (double-buffered)
                + f2_foot                           # feature2
                + 16 * TM * 4)                      # psum/out/scratch (f32, tiny)
        if foot <= budget or TN == 128:
            break
        tn_try = TN // 2
    n_col_tiles = M_pad // TN
    pad_cols = int(M_pad - M)

    vmem_limit = int(min(budget, max(32 * 1024 * 1024, 2 * foot + (8 << 20))))

    # ---- cast + pad inputs (features/weight_mask in bf16) ------------------
    f1 = feature1.astype(cdt)
    f2 = feature2.astype(cdt)
    wm = weight_mask.astype(cdt)
    if (N_pad, D_pad) != (N, D):
        f1 = jnp.pad(f1, ((0, N_pad - N), (0, D_pad - D)))
    if (M_pad, D_pad) != (M, D):
        f2 = jnp.pad(f2, ((0, M_pad - M), (0, D_pad - D)))   # zero pad (required)
    if (N_pad, M_pad) != (N, M):
        wm = jnp.pad(wm, ((0, N_pad - N), (0, M_pad - M)))
    if N_pad != N:
        psum = jnp.pad(psum, ((0, N_pad - N), (0, 0)), constant_values=1.0)

    kernel = functools.partial(
        _supcon_kernel,
        inv_temp=float(1.0 / temperature),
        tn=TN,
        pad_cols=pad_cols,
        f2_resident=f2_resident,
    )

    if f2_resident:
        # One constant block: Pallas DMAs feature2 from HBM exactly once.
        f2_spec = pl.BlockSpec((M_pad, D_pad), lambda i, j: (0, 0))
    else:
        f2_spec = pl.BlockSpec((TN, D_pad), lambda i, j: (j, 0))

    f2_passes = 1 if f2_resident else n_row_tiles
    bytes_accessed = int(
        f1.size * itemsize
        + f2_passes * f2.size * itemsize
        + wm.size * itemsize
        + psum.size * 4
        + N_pad * 4)

    out = pl.pallas_call(
        kernel,
        out_shape=jax.ShapeDtypeStruct((N_pad, 1), jnp.float32),
        grid_spec=pltpu.PrefetchScalarGridSpec(
            num_scalar_prefetch=0,
            grid=(n_row_tiles, n_col_tiles),
            in_specs=[
                pl.BlockSpec((TM, D_pad), lambda i, j: (i, 0)),   # feature1 tile
                f2_spec,                                          # feature2
                pl.BlockSpec((TM, TN),    lambda i, j: (i, j)),   # weight_mask tile
                pl.BlockSpec((TM, 1),     lambda i, j: (i, 0)),   # positive row-sums
            ],
            out_specs=pl.BlockSpec((TM, 1), lambda i, j: (i, 0)),
            scratch_shapes=[
                pltpu.VMEM((TM, 1), jnp.float32),   # running max
                pltpu.VMEM((TM, 1), jnp.float32),   # running sum exp
                pltpu.VMEM((TM, 1), jnp.float32),   # sum wm * sim
                pltpu.VMEM((TM, 1), jnp.float32),   # sum wm
            ]),
        compiler_params=pltpu.CompilerParams(
            dimension_semantics=("parallel", "arbitrary"),
            vmem_limit_bytes=vmem_limit),
        cost_estimate=pl.CostEstimate(
            flops=2 * N_pad * M_pad * D_pad + 6 * N_pad * M_pad,
            transcendentals=N_pad * M_pad,
            bytes_accessed=bytes_accessed),
    )(f1, f2, wm, psum)

    # Final tiny mean over the N valid rows is finished in XLA.
    return jnp.mean(out[:N, 0])


def _reference(feature1, feature2, positive_mask, weight_mask, temperature=2.5):
    """Pure-JAX mirror of the torch module (f32 math on the given inputs)."""
    f1 = feature1.astype(jnp.float32)
    f2 = feature2.astype(jnp.float32)
    wm = weight_mask.astype(jnp.float32)
    sim = jnp.matmul(f1, f2.T, precision=lax.Precision.HIGHEST) / temperature
    exp_logits = jnp.exp(sim)
    log_prob = sim - jnp.log(exp_logits.sum(1, keepdims=True))
    mean_log_prob_pos = -(wm * log_prob).sum(1) / positive_mask.sum(1)
    return mean_log_prob_pos.mean()


def _make_inputs(key, N, M, D):
    k1, k2, k3, k4 = jax.random.split(key, 4)
    feature1 = jax.random.normal(k1, (N, D), dtype=jnp.float32)
    feature2 = jax.random.normal(k2, (M, D), dtype=jnp.float32)
    positive_mask = (jax.random.uniform(k3, (N, M)) > 0.5).astype(jnp.float32)
    positive_mask = positive_mask.at[:, 0].set(1.0)   # avoid divide-by-zero rows
    weight_mask = jax.random.uniform(k4, (N, M), dtype=jnp.float32)
    return feature1, feature2, positive_mask, weight_mask


def _check(f1, f2, pm, wm, temperature=2.5):
    loss = supcon_loss(f1, f2, pm, wm, temperature=temperature)
    jax.block_until_ready(loss)
    # Validate the kernel math against the module formula applied to the same
    # bf16-rounded inputs the kernel consumes (isolates kernel error from the
    # intentional bf16 quantization, which the perf review accepts).
    ref_q = _reference(f1.astype(jnp.bfloat16), f2.astype(jnp.bfloat16),
                       pm, wm.astype(jnp.bfloat16), temperature)
    assert jnp.allclose(loss, ref_q, rtol=2e-3, atol=1e-3), (loss, ref_q)
    return loss


if __name__ == "__main__":
    key = jax.random.PRNGKey(0)
    k_small, k_big = jax.random.split(key)

    # Small shape consistent with the module (single tile, padded M / D).
    f1, f2, pm, wm = _make_inputs(k_small, N=8, M=8, D=32)
    _check(f1, f2, pm, wm, temperature=2.5)

    # Larger case exercising multiple row tiles (megacore 'parallel' axis),
    # VMEM-resident feature2, padded columns with the analytic LSE correction.
    f1, f2, pm, wm = _make_inputs(k_big, N=300, M=1100, D=40)
    _check(f1, f2, pm, wm, temperature=2.5)

    print("KERNEL_OK")
</pallas_src>

<mosaic_0001>
module attributes {stable_mosaic.version = 11 : i64} {
  func.func @_supcon_kernel(%arg0: i32, %arg1: i32, %arg2: memref<16x128xbf16, #tpu.memory_space<vmem>>, %arg3: memref<128x128xbf16, #tpu.memory_space<vmem>>, %arg4: memref<16x128xbf16, #tpu.memory_space<vmem>>, %arg5: memref<16x1xf32, #tpu.memory_space<vmem>>, %arg6: memref<16x1xf32, #tpu.memory_space<vmem>>, %arg7: memref<16x1xf32, #tpu.memory_space<vmem>>, %arg8: memref<16x1xf32, #tpu.memory_space<vmem>>, %arg9: memref<16x1xf32, #tpu.memory_space<vmem>>, %arg10: memref<16x1xf32, #tpu.memory_space<vmem>>) attributes {dimension_semantics = [#tpu.dimension_semantics<parallel>, #tpu.dimension_semantics<arbitrary>], iteration_bounds = array<i64: 1, 1>, scalar_prefetch = 0 : i64, scratch_operands = 4 : i64, tpu.core_type = #tpu.core_type<tc>, window_params = [{transform_indices = @transform_0, window_bounds = array<i64: 16, 128>}, {transform_indices = @transform_1, window_bounds = array<i64: 128, 128>}, {transform_indices = @transform_2, window_bounds = array<i64: 16, 128>}, {transform_indices = @transform_3, window_bounds = array<i64: 16, 1>}, {transform_indices = @transform_4, window_bounds = array<i64: 16, 1>}]} {
    %c0_i32 = arith.constant 0 : i32
    %0 = arith.cmpi eq, %arg1, %c0_i32 : i32
    %1 = arith.extui %0 : i1 to i32
    %c0_i32_0 = arith.constant 0 : i32
    %2 = arith.cmpi ne, %1, %c0_i32_0 : i32
    scf.if %2 {
      %cst_29 = arith.constant 0xFF800000 : f32
      %40 = vector.broadcast %cst_29 : f32 to vector<16x1xf32>
      %c0_30 = arith.constant 0 : index
      %c0_31 = arith.constant 0 : index
      %41 = vector.load %arg7[%c0_30, %c0_31] : memref<16x1xf32, #tpu.memory_space<vmem>>, vector<16x1xf32>
      tpu.vector_store %arg7[%c0_30, %c0_31], %40 {strides = array<i32>} : memref<16x1xf32, #tpu.memory_space<vmem>>, vector<16x1xf32>,
      %cst_32 = arith.constant 0.000000e+00 : f32
      %42 = vector.broadcast %cst_32 : f32 to vector<16x1xf32>
      %c0_33 = arith.constant 0 : index
      %c0_34 = arith.constant 0 : index
      %43 = vector.load %arg8[%c0_33, %c0_34] : memref<16x1xf32, #tpu.memory_space<vmem>>, vector<16x1xf32>
      tpu.vector_store %arg8[%c0_33, %c0_34], %42 {strides = array<i32>} : memref<16x1xf32, #tpu.memory_space<vmem>>, vector<16x1xf32>,
      %cst_35 = arith.constant 0.000000e+00 : f32
      %44 = vector.broadcast %cst_35 : f32 to vector<16x1xf32>
      %c0_36 = arith.constant 0 : index
      %c0_37 = arith.constant 0 : index
      %45 = vector.load %arg9[%c0_36, %c0_37] : memref<16x1xf32, #tpu.memory_space<vmem>>, vector<16x1xf32>
      tpu.vector_store %arg9[%c0_36, %c0_37], %44 {strides = array<i32>} : memref<16x1xf32, #tpu.memory_space<vmem>>, vector<16x1xf32>,
      %cst_38 = arith.constant 0.000000e+00 : f32
      %46 = vector.broadcast %cst_38 : f32 to vector<16x1xf32>
      %c0_39 = arith.constant 0 : index
      %c0_40 = arith.constant 0 : index
      %47 = vector.load %arg10[%c0_39, %c0_40] : memref<16x1xf32, #tpu.memory_space<vmem>>, vector<16x1xf32>
      tpu.vector_store %arg10[%c0_39, %c0_40], %46 {strides = array<i32>} : memref<16x1xf32, #tpu.memory_space<vmem>>, vector<16x1xf32>,
    } else {
    }
    %c0 = arith.constant 0 : index
    %c0_1 = arith.constant 0 : index
    %3 = vector.load %arg3[%c0, %c0_1] : memref<128x128xbf16, #tpu.memory_space<vmem>>, vector<128x128xbf16>
    %c0_2 = arith.constant 0 : index
    %c0_3 = arith.constant 0 : index
    %4 = vector.load %arg2[%c0_2, %c0_3] : memref<16x128xbf16, #tpu.memory_space<vmem>>, vector<16x128xbf16>
    %cst = arith.constant dense<0.000000e+00> : vector<16x128xf32>
    %5 = tpu.matmul %4, %3, %cst {dimension_numbers = #tpu.dot_dimension_numbers<[1], [1], [0], [0], [0, 0, 1, 0], [], []>} : vector<16x128xbf16>, vector<128x128xbf16>, vector<16x128xf32> -> vector<16x128xf32>
    %cst_4 = arith.constant 4.000000e-01 : f32
    %6 = vector.broadcast %cst_4 : f32 to vector<16x128xf32>
    %7 = arith.mulf %5, %6 : vector<16x128xf32>
    %c0_5 = arith.constant 0 : index
    %c0_6 = arith.constant 0 : index
    %8 = vector.load %arg4[%c0_5, %c0_6] : memref<16x128xbf16, #tpu.memory_space<vmem>>, vector<16x128xbf16>
    %9 = arith.extf %8 : vector<16x128xbf16> to vector<16x128xf32>
    %c0_7 = arith.constant 0 : index
    %c0_8 = arith.constant 0 : index
    %10 = vector.load %arg7[%c0_7, %c0_8] : memref<16x1xf32, #tpu.memory_space<vmem>>, vector<16x1xf32>
    %cst_9 = arith.constant dense<0xFF800000> : vector<16xf32>
    %11 = vector.multi_reduction <maximumf>, %7, %cst_9 [1] : vector<16x128xf32> to vector<16xf32>
    %12 = vector.shape_cast %11 : vector<16xf32> to vector<16x1xf32>
    %13 = arith.maximumf %10, %12 : vector<16x1xf32>
    %c0_10 = arith.constant 0 : index
    %c0_11 = arith.constant 0 : index
    %14 = vector.load %arg8[%c0_10, %c0_11] : memref<16x1xf32, #tpu.memory_space<vmem>>, vector<16x1xf32>
    %15 = arith.subf %10, %13 : vector<16x1xf32>
    %16 = math.exp %15 : vector<16x1xf32>
    %17 = arith.mulf %14, %16 : vector<16x1xf32>
    %18 = vector.broadcast %13 : vector<16x1xf32> to vector<16x128xf32>
    %19 = arith.subf %7, %18 : vector<16x128xf32>
    %20 = math.exp %19 : vector<16x128xf32>
    %cst_12 = arith.constant dense<0.000000e+00> : vector<16xf32>
    %21 = vector.multi_reduction <add>, %20, %cst_12 [1] : vector<16x128xf32> to vector<16xf32>
    %22 = vector.shape_cast %21 : vector<16xf32> to vector<16x1xf32>
    %23 = arith.addf %17, %22 : vector<16x1xf32>
    %c0_13 = arith.constant 0 : index
    %c0_14 = arith.constant 0 : index
    %24 = vector.load %arg8[%c0_13, %c0_14] : memref<16x1xf32, #tpu.memory_space<vmem>>, vector<16x1xf32>
    tpu.vector_store %arg8[%c0_13, %c0_14], %23 {strides = array<i32>} : memref<16x1xf32, #tpu.memory_space<vmem>>, vector<16x1xf32>,
    %c0_15 = arith.constant 0 : index
    %c0_16 = arith.constant 0 : index
    %25 = vector.load %arg7[%c0_15, %c0_16] : memref<16x1xf32, #tpu.memory_space<vmem>>, vector<16x1xf32>
    tpu.vector_store %arg7[%c0_15, %c0_16], %13 {strides = array<i32>} : memref<16x1xf32, #tpu.memory_space<vmem>>, vector<16x1xf32>,
    %c0_17 = arith.constant 0 : index
    %c0_18 = arith.constant 0 : index
    %26 = vector.load %arg9[%c0_17, %c0_18] : memref<16x1xf32, #tpu.memory_space<vmem>>, vector<16x1xf32>
    %27 = arith.mulf %9, %7 : vector<16x128xf32>
    %cst_19 = arith.constant dense<0.000000e+00> : vector<16xf32>
    %28 = vector.multi_reduction <add>, %27, %cst_19 [1] : vector<16x128xf32> to vector<16xf32>
    %29 = vector.shape_cast %28 : vector<16xf32> to vector<16x1xf32>
    %30 = arith.addf %26, %29 : vector<16x1xf32>
    %c0_20 = arith.constant 0 : index
    %c0_21 = arith.constant 0 : index
    %31 = vector.load %arg9[%c0_20, %c0_21] : memref<16x1xf32, #tpu.memory_space<vmem>>, vector<16x1xf32>
    tpu.vector_store %arg9[%c0_20, %c0_21], %30 {strides = array<i32>} : memref<16x1xf32, #tpu.memory_space<vmem>>, vector<16x1xf32>,
    %c0_22 = arith.constant 0 : index
    %c0_23 = arith.constant 0 : index
    %32 = vector.load %arg10[%c0_22, %c0_23] : memref<16x1xf32, #tpu.memory_space<vmem>>, vector<16x1xf32>
    %cst_24 = arith.constant dense<0.000000e+00> : vector<16xf32>
    %33 = vector.multi_reduction <add>, %9, %cst_24 [1] : vector<16x128xf32> to vector<16xf32>
    %34 = vector.shape_cast %33 : vector<16xf32> to vector<16x1xf32>
    %35 = arith.addf %32, %34 : vector<16x1xf32>
    %c0_25 = arith.constant 0 : index
    %c0_26 = arith.constant 0 : index
    %36 = vector.load %arg10[%c0_25, %c0_26] : memref<16x1xf32, #tpu.memory_space<vmem>>, vector<16x1xf32>
    tpu.vector_store %arg10[%c0_25, %c0_26], %35 {strides = array<i32>} : memref<16x1xf32, #tpu.memory_space<vmem>>, vector<16x1xf32>,
    %c0_i32_27 = arith.constant 0 : i32
    %37 = arith.cmpi eq, %arg1, %c0_i32_27 : i32
    %38 = arith.extui %37 : i1 to i32
    %c0_i32_28 = arith.constant 0 : i32
    %39 = arith.cmpi ne, %38, %c0_i32_28 : i32
    scf.if %39 {
      %c0_29 = arith.constant 0 : index
      %c0_30 = arith.constant 0 : index
      %40 = vector.load %arg8[%c0_29, %c0_30] : memref<16x1xf32, #tpu.memory_space<vmem>>, vector<16x1xf32>
      %c0_31 = arith.constant 0 : index
      %c0_32 = arith.constant 0 : index
      %41 = vector.load %arg7[%c0_31, %c0_32] : memref<16x1xf32, #tpu.memory_space<vmem>>, vector<16x1xf32>
      %cst_33 = arith.constant 0.000000e+00 : f32
      %42 = vector.broadcast %cst_33 : f32 to vector<16x1xf32>
      %43 = arith.subf %42, %41 : vector<16x1xf32>
      %44 = math.exp %43 : vector<16x1xf32>
      %cst_34 = arith.constant 1.200000e+02 : f32
      %45 = vector.broadcast %cst_34 : f32 to vector<16x1xf32>
      %46 = arith.mulf %45, %44 : vector<16x1xf32>
      %47 = arith.subf %40, %46 : vector<16x1xf32>
      %c0_35 = arith.constant 0 : index
      %c0_36 = arith.constant 0 : index
      %48 = vector.load %arg7[%c0_35, %c0_36] : memref<16x1xf32, #tpu.memory_space<vmem>>, vector<16x1xf32>
      %49 = math.log %47 : vector<16x1xf32>
      %50 = arith.addf %48, %49 : vector<16x1xf32>
      %c0_37 = arith.constant 0 : index
      %c0_38 = arith.constant 0 : index
      %51 = vector.load %arg9[%c0_37, %c0_38] : memref<16x1xf32, #tpu.memory_space<vmem>>, vector<16x1xf32>
      %c0_39 = arith.constant 0 : index
      %c0_40 = arith.constant 0 : index
      %52 = vector.load %arg10[%c0_39, %c0_40] : memref<16x1xf32, #tpu.memory_space<vmem>>, vector<16x1xf32>
      %53 = arith.mulf %52, %50 : vector<16x1xf32>
      %54 = arith.subf %51, %53 : vector<16x1xf32>
      %cst_41 = arith.constant 0.000000e+00 : f32
      %55 = vector.broadcast %cst_41 : f32 to vector<16x1xf32>
      %56 = arith.subf %55, %54 : vector<16x1xf32>
      %c0_42 = arith.constant 0 : index
      %c0_43 = arith.constant 0 : index
      %57 = vector.load %arg5[%c0_42, %c0_43] : memref<16x1xf32, #tpu.memory_space<vmem>>, vector<16x1xf32>
      %58 = arith.divf %56, %57 : vector<16x1xf32>
      %c0_44 = arith.constant 0 : index
      %c0_45 = arith.constant 0 : index
      %59 = vector.load %arg6[%c0_44, %c0_45] : memref<16x1xf32, #tpu.memory_space<vmem>>, vector<16x1xf32>
      tpu.vector_store %arg6[%c0_44, %c0_45], %58 {strides = array<i32>} : memref<16x1xf32, #tpu.memory_space<vmem>>, vector<16x1xf32>,
    } else {
    }
    return
  }
  func.func @transform_0(%arg0: i32, %arg1: i32) -> (i32, i32) {
    %c0_i32 = arith.constant 0 : i32
    %c0_i32_0 = arith.constant 0 : i32
    return %arg0, %c0_i32 : i32, i32
  }
  func.func @transform_1(%arg0: i32, %arg1: i32) -> (i32, i32) {
    %c0_i32 = arith.constant 0 : i32
    %c0_i32_0 = arith.constant 0 : i32
    return %arg1, %c0_i32 : i32, i32
  }
  func.func @transform_2(%arg0: i32, %arg1: i32) -> (i32, i32) {
    %c0_i32 = arith.constant 0 : i32
    return %arg0, %arg1 : i32, i32
  }
  func.func @transform_3(%arg0: i32, %arg1: i32) -> (i32, i32) {
    %c0_i32 = arith.constant 0 : i32
    %c0_i32_0 = arith.constant 0 : i32
    return %arg0, %c0_i32 : i32, i32
  }
  func.func @transform_4(%arg0: i32, %arg1: i32) -> (i32, i32) {
    %c0_i32 = arith.constant 0 : i32
    %c0_i32_0 = arith.constant 0 : i32
    return %arg0, %c0_i32 : i32, i32
  }
}

</mosaic_0001>

<llo_original>
// kernel: tpu_custom_call.1
$region0: #{tpu_custom_call.1}
  #allocation0 [shape = 'u32[]', space=smem, size = 0x4, offset = 0x4, fixed_abs, tag = 'smem constant byte address 0x4 - core index']
  #allocation1 [shape = 'u32[72,128]{1,0:T(1,128)}', space=vmem, size = 0x9000, scoped, tag = 'internal scratch']
  #allocation2 [shape = 'f32[16,1]{1,0:T(8,128)}', space=vmem, size = 0x2000, scoped, tag = 'scratch operand']
  #allocation3 [shape = 'f32[16,1]{1,0:T(8,128)}', space=vmem, size = 0x2000, scoped, tag = 'scratch operand']
  #allocation4 [shape = 'f32[16,1]{1,0:T(8,128)}', space=vmem, size = 0x2000, scoped, tag = 'scratch operand']
  #allocation5 [shape = 'f32[16,1]{1,0:T(8,128)}', space=vmem, size = 0x2000, scoped, tag = 'scratch operand']
  %s0 = inlined_call_operand.vmem [shape: bf16[16,128], index: 0, kind: input, shape index: {}]
  %s1 = inlined_call_operand.hbm [shape: bf16[128,128], index: 1, kind: input, shape index: {}]
  %s2 = inlined_call_operand.vmem [shape: bf16[16,128], index: 2, kind: input, shape index: {}]
  %s3 = inlined_call_operand.vmem [shape: f32[16,1], index: 3, kind: input, shape index: {}]
  %s4 = inlined_call_operand.vmem [shape: f32[16,1], index: 4, kind: output, shape index: {}]
  %s5 = sld [smem:[#allocation0]]
  $region38: #{tpu_custom_call.1} parent=0
    _
  %s7 = ssub.s32 1, %s5
  %s8 = scalar_select 0, %s7, %s5
  $region1: #{tpu_custom_call.1} parent=0
    #allocation6 [shape = 'u8[32768]{0}', space=vmem, size = 0x8000, scoped, tag = 'input window, operand 1, single buffered']
    #allocation7 [shape = 's32[1]{0}', space=sflag, size = 0x4, scoped, tag = 'scoped memory for tpu_custom_call.1']
    %9 = vsyncpa [#allocation7], 0
    // Predicated region
    $region2: #{tpu_custom_call.1} parent=1 // pred_check
      _
    $region3: #{tpu_custom_call.1} parent=1 // pred_check_branch
      %11 = sbr.rel (0) target = $region5
    $region4: #{tpu_custom_call.1} parent=1 // pred_region
      _
    $region5: #{tpu_custom_call.1} parent=1 // pred_fallthru
      _
    // Predicated region
    $region6: #{tpu_custom_call.1} parent=1 // pred_check
      _
    $region7: #{tpu_custom_call.1} parent=1 // pred_check_branch
      %13 = sbr.rel (0) target = $region9
    $region8: #{tpu_custom_call.1} parent=1 // pred_region
      %15 = vsyncadd [#allocation7], 0
      %s16 = sshll.u32 %s1, 4
      %s17 = int_to_ptr.hbm [resolvable:$true] %s16
      %s18 = sshll.u32 [#allocation6], 4
      %s19 = int_to_ptr.vmem [resolvable:$true] %s18
      %24 = dma.hbm_to_vmem [thread:$0]  %s17, 1024, %s19, [#allocation7], 64, 64, 4
    $region9: #{tpu_custom_call.1} parent=1 // pred_fallthru
      _
    // Predicated region
    $region10: #{tpu_custom_call.1} parent=1 // pred_check
      _
    $region11: #{tpu_custom_call.1} parent=1 // pred_check_branch
      %26 = sbr.rel (0) target = $region13
    $region12: #{tpu_custom_call.1} parent=1 // pred_region
      _
    $region13: #{tpu_custom_call.1} parent=1 // pred_fallthru
      _
    // Predicated region
    $region14: #{tpu_custom_call.1} parent=1 // pred_check
      _
    $region15: #{tpu_custom_call.1} parent=1 // pred_check_branch
      %28 = sbr.rel (0) target = $region17
    $region16: #{tpu_custom_call.1} parent=1 // pred_region
      _
    $region17: #{tpu_custom_call.1} parent=1 // pred_fallthru
      _
    // Predicated region
    $region18: #{tpu_custom_call.1} parent=1 // pred_check
      _
    $region19: #{tpu_custom_call.1} parent=1 // pred_check_branch
      %30 = sbr.rel (0) target = $region21
    $region20: #{tpu_custom_call.1} parent=1 // pred_region
      %32 = dma.done [#allocation7], 1024
    $region21: #{tpu_custom_call.1} parent=1 // pred_fallthru
      _
    %p33 = scmp.eq.s32.totalorder 0, 0
    // Predicated region
    $region22: #{tpu_custom_call.1} parent=1 // pred_check
      %p34 = pneg %p33
    $region23: #{tpu_custom_call.1} parent=1 // pred_check_branch
      %36 = sbr.rel (%p34) target = $region25
    $region24: #{tpu_custom_call.1} parent=1 // pred_region
      %vm37 = vcmask 7168
      %38 = vst.msk [vmem:[#allocation2] sm:$0xff] %vm37, -inf
      %39 = vst.msk [vmem:[#allocation2 + $0x8] sm:$0xff] %vm37, -inf
      %40 = vst.msk [vmem:[#allocation3] sm:$0xff] %vm37, 0.0
      %41 = vst.msk [vmem:[#allocation3 + $0x8] sm:$0xff] %vm37, 0.0
      %42 = vst.msk [vmem:[#allocation4] sm:$0xff] %vm37, 0.0
      %43 = vst.msk [vmem:[#allocation4 + $0x8] sm:$0xff] %vm37, 0.0
      %44 = vst.msk [vmem:[#allocation5] sm:$0xff] %vm37, 0.0
      %45 = vst.msk [vmem:[#allocation5 + $0x8] sm:$0xff] %vm37, 0.0
    $region25: #{tpu_custom_call.1} parent=1 // pred_fallthru
      _
    %v46 = vld [vmem:[#allocation6] sm:$0xf]
    %v47 = vld [vmem:[#allocation6 + $0x4] sm:$0xf]
    %v48 = vld [vmem:[#allocation6 + $0x8] sm:$0xf]
    %v49 = vld [vmem:[#allocation6 + $0xc] sm:$0xf]
    %v50 = vld [vmem:[#allocation6 + $0x10] sm:$0xf]
    %v51 = vld [vmem:[#allocation6 + $0x14] sm:$0xf]
    %v52 = vld [vmem:[#allocation6 + $0x18] sm:$0xf]
    %v53 = vld [vmem:[#allocation6 + $0x1c] sm:$0xf]
    %v54 = vld [vmem:[#allocation6 + $0x20] sm:$0xf]
    %v55 = vld [vmem:[#allocation6 + $0x24] sm:$0xf]
    %v56 = vld [vmem:[#allocation6 + $0x28] sm:$0xf]
    %v57 = vld [vmem:[#allocation6 + $0x2c] sm:$0xf]
    %v58 = vld [vmem:[#allocation6 + $0x30] sm:$0xf]
    %v59 = vld [vmem:[#allocation6 + $0x34] sm:$0xf]
    %v60 = vld [vmem:[#allocation6 + $0x38] sm:$0xf]
    %v61 = vld [vmem:[#allocation6 + $0x3c] sm:$0xf]
    %v62 = vld [vmem:[%s0] sm:$0xf]
    %v63 = vld [vmem:[%s0 + $0x4] sm:$0xf]
    %v66 = vunpack.c.l.b16 %v62
    %v67 = vunpack.c.l.b16 %v63
    %v68 = vpack.c.b16 %v67, %v66
    %v86 = vunpack.c.l.b16 %v46
    %v87 = vunpack.c.l.b16 %v47
    %v88 = vunpack.c.l.b16 %v48
    %v89 = vunpack.c.l.b16 %v49
    %v90 = vunpack.c.l.b16 %v50
    %v91 = vunpack.c.l.b16 %v51
    %v92 = vunpack.c.l.b16 %v52
    %v93 = vunpack.c.l.b16 %v53
    %v94 = vunpack.c.l.b16 %v54
    %v95 = vunpack.c.l.b16 %v55
    %v96 = vunpack.c.l.b16 %v56
    %v97 = vunpack.c.l.b16 %v57
    %v98 = vunpack.c.l.b16 %v58
    %v99 = vunpack.c.l.b16 %v59
    %v100 = vunpack.c.l.b16 %v60
    %v101 = vunpack.c.l.b16 %v61
    %v102 = vpack.c.b16 %v87, %v86
    %v103 = vpack.c.b16 %v89, %v88
    %v104 = vpack.c.b16 %v91, %v90
    %v105 = vpack.c.b16 %v93, %v92
    %v106 = vpack.c.b16 %v95, %v94
    %v107 = vpack.c.b16 %v97, %v96
    %v108 = vpack.c.b16 %v99, %v98
    %v109 = vpack.c.b16 %v101, %v100
    %118 = vmatpush.bf16.xpose.msra.mxu0 %v109
    %119 = vmatpush.bf16.xpose.msra.mxu0 %v108
    %120 = vmatpush.bf16.xpose.msra.mxu0 %v107
    %121 = vmatpush.bf16.xpose.msra.mxu0 %v106
    %122 = vmatpush.bf16.xpose.msra.mxu0 %v105
    %123 = vmatpush.bf16.xpose.msra.mxu0 %v104
    %124 = vmatpush.bf16.xpose.msra.mxu0 %v103
    %125 = vmatpush.bf16.xpose.msra.mxu0 %v102
    %126 = vmatmul.bf16.gmra.mxu0 %v68
    %v127 = vpop.f32.mrf.mxu0
    %v128 = vadd.f32 0.0, %v127
    %v129 = vpop.f32.mrf.mxu0
    %v130 = vadd.f32 0.0, %v129
    %131 = vdwg.mxu0
    %v132 = vmul.f32 %v128, 0.4
    %v133 = vmul.f32 %v130, 0.4
    %v134 = vld [vmem:[%s2] sm:$0xf]
    %v135 = vld [vmem:[%s2 + $0x4] sm:$0xf]
    %v136 = vunpack.c.l.bf16 %v134
    %v137 = vunpack.c.l.bf16 %v135
    %v138 = vld [vmem:[#allocation2] sm:$0xff]
    %v139 = vld [vmem:[#allocation2 + $0x8] sm:$0xff]
    %140 = vmax.xlane.f32.xlu0 %v132
    %v141 = vpop.xlane.xlu0 %140
    %142 = vmax.xlane.f32.xlu0 %v133
    %v143 = vpop.xlane.xlu0 %142
    %v144 = vmax.f32 %v138, %v141
    %v145 = vmax.f32 %v139, %v143
    %v146 = vld [vmem:[#allocation3] sm:$0xff]
    %v147 = vld [vmem:[#allocation3 + $0x8] sm:$0xff]
    %v148 = vsub.f32 %v138, %v144
    %v149 = vsub.f32 %v139, %v145
    %v150 = vmul.f32 %v148, 1.442695
    %v151 = vpow.pop %v150
    %v152 = vmul.f32 %v149, 1.442695
    %v153 = vpow.pop %v152
    %v154 = vmul.f32 %v146, %v151
    %v155 = vmul.f32 %v147, %v153
    %157 = vset.pattern.permute.xlu0 0
    %158 = vperm.xlu0 %157, %v144
    %v159 = vpop.permute.xlu0 %158
    %162 = vset.pattern.permute.xlu0 0
    %163 = vperm.xlu0 %162, %v145
    %v164 = vpop.permute.xlu0 %163
    %v166 = vsub.f32 %v132, %v159
    %v167 = vsub.f32 %v133, %v164
    %v168 = vmul.f32 %v166, 1.442695
    %v169 = vpow.pop %v168
    %v170 = vmul.f32 %v167, 1.442695
    %v171 = vpow.pop %v170
    %172 = vadd.xlane.f32.xlu0 %v169
    %v173 = vpop.xlane.xlu0 %172
    %174 = vadd.xlane.f32.xlu0 %v171
    %v175 = vpop.xlane.xlu0 %174
    %v176 = vadd.f32 %v154, %v173
    %v177 = vadd.f32 %v155, %v175
    %vm178 = vcmask 7168
    %179 = vst.msk [vmem:[#allocation3] sm:$0xff] %vm178, %v176
    %180 = vst.msk [vmem:[#allocation3 + $0x8] sm:$0xff] %vm178, %v177
    %181 = vst.msk [vmem:[#allocation2] sm:$0xff] %vm178, %v144
    %182 = vst.msk [vmem:[#allocation2 + $0x8] sm:$0xff] %vm178, %v145
    %v183 = vld [vmem:[#allocation4] sm:$0xff]
    %v184 = vld [vmem:[#allocation4 + $0x8] sm:$0xff]
    %v185 = vmul.f32 %v136, %v132
    %v186 = vmul.f32 %v137, %v133
    %187 = vadd.xlane.f32.xlu0 %v185
    %v188 = vpop.xlane.xlu0 %187
    %189 = vadd.xlane.f32.xlu0 %v186
    %v190 = vpop.xlane.xlu0 %189
    %v191 = vadd.f32 %v183, %v188
    %v192 = vadd.f32 %v184, %v190
    %193 = vst.msk [vmem:[#allocation4] sm:$0xff] %vm178, %v191
    %194 = vst.msk [vmem:[#allocation4 + $0x8] sm:$0xff] %vm178, %v192
    %v195 = vld [vmem:[#allocation5] sm:$0xff]
    %v196 = vld [vmem:[#allocation5 + $0x8] sm:$0xff]
    %197 = vadd.xlane.f32.xlu0 %v136
    %v198 = vpop.xlane.xlu0 %197
    %199 = vadd.xlane.f32.xlu0 %v137
    %v200 = vpop.xlane.xlu0 %199
    %v201 = vadd.f32 %v195, %v198
    %v202 = vadd.f32 %v196, %v200
    %203 = vst.msk [vmem:[#allocation5] sm:$0xff] %vm178, %v201
    %204 = vst.msk [vmem:[#allocation5 + $0x8] sm:$0xff] %vm178, %v202
    // Predicated region
    $region26: #{tpu_custom_call.1} parent=1 // pred_check
      %p205 = pneg %p33
    $region27: #{tpu_custom_call.1} parent=1 // pred_check_branch
      %207 = sbr.rel (%p205) target = $region29
    $region28: #{tpu_custom_call.1} parent=1 // pred_region
      %v208 = vld [vmem:[#allocation3] sm:$0xff]
      %v209 = vld [vmem:[#allocation3 + $0x8] sm:$0xff]
      %v210 = vld [vmem:[#allocation2] sm:$0xff]
      %v211 = vld [vmem:[#allocation2 + $0x8] sm:$0xff]
      %v212 = vsub.f32 0.0, %v210
      %v213 = vsub.f32 0.0, %v211
      %v214 = vmul.f32 %v212, 1.442695
      %v215 = vpow.pop %v214
      %v216 = vmul.f32 %v213, 1.442695
      %v217 = vpow.pop %v216
      %v218 = vmul.f32 %v215, 120.0
      %v219 = vmul.f32 %v217, 120.0
      %v220 = vsub.f32 %v208, %v218
      %v221 = vsub.f32 %v209, %v219
      %v222 = vlog2.pop %v220
      %v223 = vmul.f32 %v222, 0.6931472
      %v224 = vlog2.pop %v221
      %v225 = vmul.f32 %v224, 0.6931472
      %v226 = vadd.f32 %v210, %v223
      %v227 = vadd.f32 %v211, %v225
      %v228 = vld [vmem:[#allocation4] sm:$0xff]
      %v229 = vld [vmem:[#allocation4 + $0x8] sm:$0xff]
      %v230 = vld [vmem:[#allocation5] sm:$0xff]
      %v231 = vld [vmem:[#allocation5 + $0x8] sm:$0xff]
      %v232 = vmul.f32 %v230, %v226
      %v233 = vmul.f32 %v231, %v227
      %v234 = vsub.f32 %v228, %v232
      %v235 = vsub.f32 %v229, %v233
      %v236 = vsub.f32 0.0, %v234
      %v237 = vsub.f32 0.0, %v235
      %v238 = vld [vmem:[%s3] sm:$0xff]
      %v239 = vld [vmem:[%s3 + $0x8] sm:$0xff]
      %v240 = vrcp.pop %v238
      %v241 = vmul.f32 %v238, %v240
      %v242 = vsub.f32 1.0, %v241
      %v243 = vmul.f32 %v240, %v242
      %v244 = vadd.f32 %v240, %v243
      %vm245 = vweird.f32 %v238
      %vm246 = vweird.f32 %v240
      %vm247 = vmor %vm245, %vm246
      %v248 = vsel %vm247, %v240, %v244
      %v249 = vand.u32 2147483647, %v238
      %vm250 = vcmp.eq.f32.partialorder %v249, 8.507059e+37
      %v251 = vand.u32 %v238, 2147483648
      %v252 = vor.u32 1.1754944e-38, %v251
      %v253 = vsel %vm250, %v252, %v248
      %v254 = vmul.f32 %v236, %v253
      %v255 = vrcp.pop %v239
      %v256 = vmul.f32 %v239, %v255
      %v257 = vsub.f32 1.0, %v256
      %v258 = vmul.f32 %v255, %v257
      %v259 = vadd.f32 %v255, %v258
      %vm260 = vweird.f32 %v239
      %vm261 = vweird.f32 %v255
      %vm262 = vmor %vm260, %vm261
      %v263 = vsel %vm262, %v255, %v259
      %v264 = vand.u32 2147483647, %v239
      %vm265 = vcmp.eq.f32.partialorder %v264, 8.507059e+37
      %v266 = vand.u32 %v239, 2147483648
      %v267 = vor.u32 1.1754944e-38, %v266
      %v268 = vsel %vm265, %v267, %v263
      %v269 = vmul.f32 %v237, %v268
      %270 = vst.msk [vmem:[%s4] sm:$0xff] %vm178, %v254
      %271 = vst.msk [vmem:[%s4 + $0x8] sm:$0xff] %vm178, %v269
    $region29: #{tpu_custom_call.1} parent=1 // pred_fallthru
      _
    // Predicated region
    $region30: #{tpu_custom_call.1} parent=1 // pred_check
      _
    $region31: #{tpu_custom_call.1} parent=1 // pred_check_branch
      %273 = sbr.rel (0) target = $region33
    $region32: #{tpu_custom_call.1} parent=1 // pred_region
      _
    $region33: #{tpu_custom_call.1} parent=1 // pred_fallthru
      _
    // Predicated region
    $region34: #{tpu_custom_call.1} parent=1 // pred_check
      _
    $region35: #{tpu_custom_call.1} parent=1 // pred_check_branch
      %275 = sbr.rel (0) target = $region37
    $region36: #{tpu_custom_call.1} parent=1 // pred_region
      _
    $region37: #{tpu_custom_call.1} parent=1 // pred_fallthru
      _
    %276 = vsyncpa [#allocation7], 1

</llo_original>
